<compile_context>
chip_gen: v5e
topology: v5e:2x2
jax: 0.10.0
libtpu: 0.0.40
codegen_flags: <defaults>
</compile_context>

<pallas_src>
import math
import numpy as np
import jax
import jax.numpy as jnp
from jax.experimental import pallas as pl
from jax.experimental.pallas import tpu as pltpu  # noqa: F401  (TPU backend)

# hyper-parameters (module-level globals, as in the PyTorch spec)
d_model = 32
d_q = 16
d_k = 16
d_v = 16
n_heads = 4

B = 2   # batch
S = 8   # sequence length


# -------------------------------------------------------------------------
# Fused kernel: projections + attention + out-proj + residual + LayerNorm
# -------------------------------------------------------------------------
def mha_fused_kernel(q_ref, k_ref, v_ref, mask_ref,
                     wq_ref, bq_ref, wk_ref, bk_ref, wv_ref, bv_ref,
                     wout_ref, bout_ref, g_ref, beta_ref,
                     out_ref, attn_ref):
    Bsz, Sq, D = q_ref.shape
    Sk = k_ref.shape[1]
    H = attn_ref.shape[1]
    dq = wq_ref.shape[1] // H
    dk = wk_ref.shape[1] // H
    dv = wv_ref.shape[1] // H
    BSq = Bsz * Sq
    BSk = Bsz * Sk

    q2 = q_ref[...].reshape(BSq, D)      # also the residual
    k2 = k_ref[...].reshape(BSk, D)
    v2 = v_ref[...].reshape(BSk, D)
    mask = mask_ref[...]                 # [B, Sq, Sk] int32, nonzero = masked out

    # Full-width projections: one lane-dense MXU matmul each (H*d = 64 lanes).
    # NOTE: 1/sqrt(d_k) is pre-folded into wq/bq, so no per-score scaling below.
    q_all = jnp.dot(q2, wq_ref[...], preferred_element_type=jnp.float32) + bq_ref[...]
    k_all = jnp.dot(k2, wk_ref[...], preferred_element_type=jnp.float32) + bk_ref[...]
    v_all = jnp.dot(v2, wv_ref[...], preferred_element_type=jnp.float32) + bv_ref[...]

    ctx_heads = []
    # Trace-time unrolled loop over heads; everything stays in vregs / VMEM.
    for h in range(H):
        qh = q_all[:, h * dq:(h + 1) * dq].reshape(Bsz, Sq, dq)
        kh = k_all[:, h * dk:(h + 1) * dk].reshape(Bsz, Sk, dk)
        vh = v_all[:, h * dv:(h + 1) * dv].reshape(Bsz, Sk, dv)

        # scores = (Q / sqrt(d_k)) K^T  — batched over B, NT contraction
        s = jnp.einsum('bqd,bkd->bqk', qh, kh,
                       preferred_element_type=jnp.float32)
        s = jnp.where(mask != 0, jnp.float32(-1e9), s)       # masked_fill_(-1e9)

        # softmax over the key axis (EUP approx reciprocal for the denominator)
        m = jnp.max(s, axis=-1, keepdims=True)
        e = jnp.exp(s - m)
        p = e * pl.reciprocal(jnp.sum(e, axis=-1, keepdims=True), approx=True)

        attn_ref[:, h, :, :] = p.astype(attn_ref.dtype)

        # per-head context = attn @ V
        ctx = jnp.einsum('bqk,bkd->bqd', p, vh,
                         preferred_element_type=jnp.float32)
        ctx_heads.append(ctx.reshape(BSq, dv))

    # Merge heads in PyTorch order ([head0 | head1 | ...]) and do one
    # lane-dense output projection [BSq, H*dv] @ [H*dv, d_model].
    ctx_all = jnp.concatenate(ctx_heads, axis=-1)
    out = (jnp.dot(ctx_all, wout_ref[...], preferred_element_type=jnp.float32)
           + bout_ref[...])

    # residual add, then LayerNorm (eps=1e-5, biased variance)
    x = out + q2
    mean = jnp.mean(x, axis=-1, keepdims=True)
    xc = x - mean
    var = jnp.mean(xc * xc, axis=-1, keepdims=True)
    y = xc * jax.lax.rsqrt(var + 1e-5)
    y = y * g_ref[...] + beta_ref[...]
    out_ref[...] = y.reshape(Bsz, Sq, D).astype(out_ref.dtype)


# -------------------------------------------------------------------------
# Parameters
# -------------------------------------------------------------------------
def init_params(key):
    """Deterministic init mimicking nn.Linear default (uniform +/- 1/sqrt(fan_in))."""
    def linear_init(k, fan_in, fan_out):
        kw, kb = jax.random.split(k)
        bound = 1.0 / math.sqrt(fan_in)
        w = jax.random.uniform(kw, (fan_in, fan_out), jnp.float32, -bound, bound)
        b = jax.random.uniform(kb, (1, fan_out), jnp.float32, -bound, bound)
        return w, b

    k1, k2, k3, k4 = jax.random.split(key, 4)
    return {
        "W_Q": linear_init(k1, d_model, d_q * n_heads),
        "W_K": linear_init(k2, d_model, d_k * n_heads),
        "W_V": linear_init(k3, d_model, d_v * n_heads),
        "out": linear_init(k4, n_heads * d_v, d_model),
        "ln_g": jnp.ones((1, d_model), jnp.float32),
        "ln_b": jnp.zeros((1, d_model), jnp.float32),
    }


def fuse_params(params):
    """One-time fusion for the kernel: the 1/sqrt(d_k) score scale is folded
    into W_Q / b_Q.  No per-head repacking is needed — the PyTorch column /
    row grouping (head-major) is used directly inside the kernel.
    NOTE: the reference scales by sqrt(d_k) even though the contraction is
    over d_q; this matches PyTorch only because d_q == d_k in this config."""
    scale = jnp.float32(1.0 / math.sqrt(d_k))
    wq, bq = params["W_Q"]
    wk, bk = params["W_K"]
    wv, bv = params["W_V"]
    wo, bo = params["out"]
    return {
        "wq": wq * scale, "bq": bq * scale,
        "wk": wk, "bk": bk,
        "wv": wv, "bv": bv,
        "wout": wo, "bout": bo,
        "ln_g": params["ln_g"],
        "ln_b": params["ln_b"],
    }


# -------------------------------------------------------------------------
# Forward
# -------------------------------------------------------------------------
def multi_head_attention(fused, Q, K, V, attn_mask):
    """Q, K, V: [B, S, d_model]; attn_mask: bool [B, S_q, S_k] (True = masked)."""
    assert Q.shape[0] == K.shape[0] == V.shape[0], "Q K V batch_size is not eq!"
    Bsz, Sq, Dm = Q.shape
    Sk = K.shape[1]
    mask_i32 = attn_mask.astype(jnp.int32)

    out, attn = pl.pallas_call(
        mha_fused_kernel,
        out_shape=(
            jax.ShapeDtypeStruct((Bsz, Sq, Dm), Q.dtype),
            jax.ShapeDtypeStruct((Bsz, n_heads, Sq, Sk), jnp.float32),
        ),
    )(Q, K, V, mask_i32,
      fused["wq"], fused["bq"], fused["wk"], fused["bk"],
      fused["wv"], fused["bv"], fused["wout"], fused["bout"],
      fused["ln_g"], fused["ln_b"])
    return out, attn


# -------------------------------------------------------------------------
# Pure-JAX reference (mirrors the PyTorch module) for a sanity check
# -------------------------------------------------------------------------
def reference_mha(params, Q, K, V, attn_mask):
    wq, bq = params["W_Q"]; wk, bk = params["W_K"]; wv, bv = params["W_V"]
    wo, bo = params["out"]
    Bsz = Q.shape[0]
    q_s = (Q.reshape(-1, d_model) @ wq + bq).reshape(Bsz, -1, n_heads, d_q).transpose(0, 2, 1, 3)
    k_s = (K.reshape(-1, d_model) @ wk + bk).reshape(Bsz, -1, n_heads, d_k).transpose(0, 2, 1, 3)
    v_s = (V.reshape(-1, d_model) @ wv + bv).reshape(Bsz, -1, n_heads, d_v).transpose(0, 2, 1, 3)
    scores = jnp.einsum('bhqd,bhkd->bhqk', q_s, k_s) / np.sqrt(d_k)
    scores = jnp.where(attn_mask[:, None, :, :], jnp.float32(-1e9), scores)
    attn = jax.nn.softmax(scores, axis=-1)
    ctx = jnp.einsum('bhqk,bhkd->bhqd', attn, v_s)
    ctx = ctx.transpose(0, 2, 1, 3).reshape(Bsz, -1, n_heads * d_v)
    out = ctx.reshape(-1, n_heads * d_v) @ wo + bo
    x = out + Q.reshape(-1, d_model)
    mean = x.mean(-1, keepdims=True)
    var = ((x - mean) ** 2).mean(-1, keepdims=True)
    y = (x - mean) / jnp.sqrt(var + 1e-5) * params["ln_g"] + params["ln_b"]
    return y.reshape(Bsz, -1, d_model), attn


if __name__ == "__main__":
    key = jax.random.PRNGKey(0)
    kp, kq, kk, kv = jax.random.split(key, 4)

    params = init_params(kp)
    fused = fuse_params(params)

    Q = jax.random.normal(kq, (B, S, d_model), jnp.float32)
    K = jax.random.normal(kk, (B, S, d_model), jnp.float32)
    V = jax.random.normal(kv, (B, S, d_model), jnp.float32)

    # Causal mask (True = masked out), like a standard subsequent mask.
    causal = jnp.triu(jnp.ones((S, S), dtype=bool), k=1)
    attn_mask = jnp.broadcast_to(causal, (B, S, S))

    mha = jax.jit(multi_head_attention)
    output, attn = mha(fused, Q, K, V, attn_mask)
    jax.block_until_ready((output, attn))

    assert output.shape == (B, S, d_model)
    assert attn.shape == (B, n_heads, S, S)
    assert bool(jnp.all(jnp.isfinite(output))) and bool(jnp.all(jnp.isfinite(attn)))

    # Sanity vs pure-JAX reference (loose tolerance: default-precision MXU
    # matmul passes + approx reciprocal softmax denominator).
    ref_out, ref_attn = reference_mha(params, Q, K, V, attn_mask)
    assert float(jnp.max(jnp.abs(attn - ref_attn))) < 5e-2
    assert float(jnp.max(jnp.abs(output - ref_out))) < 1e-1

    print("KERNEL_OK")
</pallas_src>

<mosaic_0001>
module attributes {stable_mosaic.version = 11 : i64} {
  func.func @mha_fused_kernel(%arg0: memref<2x8x32xf32, #tpu.memory_space<vmem>>, %arg1: memref<2x8x32xf32, #tpu.memory_space<vmem>>, %arg2: memref<2x8x32xf32, #tpu.memory_space<vmem>>, %arg3: memref<2x8x8xi32, #tpu.memory_space<vmem>>, %arg4: memref<32x64xf32, #tpu.memory_space<vmem>>, %arg5: memref<1x64xf32, #tpu.memory_space<vmem>>, %arg6: memref<32x64xf32, #tpu.memory_space<vmem>>, %arg7: memref<1x64xf32, #tpu.memory_space<vmem>>, %arg8: memref<32x64xf32, #tpu.memory_space<vmem>>, %arg9: memref<1x64xf32, #tpu.memory_space<vmem>>, %arg10: memref<64x32xf32, #tpu.memory_space<vmem>>, %arg11: memref<1x32xf32, #tpu.memory_space<vmem>>, %arg12: memref<1x32xf32, #tpu.memory_space<vmem>>, %arg13: memref<1x32xf32, #tpu.memory_space<vmem>>, %arg14: memref<2x8x32xf32, #tpu.memory_space<vmem>>, %arg15: memref<2x4x8x8xf32, #tpu.memory_space<vmem>>) attributes {dimension_semantics = [], scalar_prefetch = 0 : i64, scratch_operands = 0 : i64, tpu.core_type = #tpu.core_type<tc>} {
    %c0 = arith.constant 0 : index
    %c0_0 = arith.constant 0 : index
    %c0_1 = arith.constant 0 : index
    %0 = vector.load %arg0[%c0, %c0_0, %c0_1] : memref<2x8x32xf32, #tpu.memory_space<vmem>>, vector<2x8x32xf32>
    %1 = vector.shape_cast %0 : vector<2x8x32xf32> to vector<16x32xf32>
    %c0_2 = arith.constant 0 : index
    %c0_3 = arith.constant 0 : index
    %c0_4 = arith.constant 0 : index
    %2 = vector.load %arg1[%c0_2, %c0_3, %c0_4] : memref<2x8x32xf32, #tpu.memory_space<vmem>>, vector<2x8x32xf32>
    %3 = vector.shape_cast %2 : vector<2x8x32xf32> to vector<16x32xf32>
    %c0_5 = arith.constant 0 : index
    %c0_6 = arith.constant 0 : index
    %c0_7 = arith.constant 0 : index
    %4 = vector.load %arg2[%c0_5, %c0_6, %c0_7] : memref<2x8x32xf32, #tpu.memory_space<vmem>>, vector<2x8x32xf32>
    %5 = vector.shape_cast %4 : vector<2x8x32xf32> to vector<16x32xf32>
    %c0_8 = arith.constant 0 : index
    %c0_9 = arith.constant 0 : index
    %c0_10 = arith.constant 0 : index
    %6 = vector.load %arg3[%c0_8, %c0_9, %c0_10] : memref<2x8x8xi32, #tpu.memory_space<vmem>>, vector<2x8x8xi32>
    %c0_11 = arith.constant 0 : index
    %c0_12 = arith.constant 0 : index
    %7 = vector.load %arg4[%c0_11, %c0_12] : memref<32x64xf32, #tpu.memory_space<vmem>>, vector<32x64xf32>
    %cst = arith.constant dense<0.000000e+00> : vector<16x64xf32>
    %8 = tpu.matmul %1, %7, %cst {dimension_numbers = #tpu.dot_dimension_numbers<[1], [0], [0], [1], [0, 0, 1, 1], [], []>} : vector<16x32xf32>, vector<32x64xf32>, vector<16x64xf32> -> vector<16x64xf32>
    %c0_13 = arith.constant 0 : index
    %c0_14 = arith.constant 0 : index
    %9 = vector.load %arg5[%c0_13, %c0_14] : memref<1x64xf32, #tpu.memory_space<vmem>>, vector<1x64xf32>
    %10 = vector.broadcast %9 : vector<1x64xf32> to vector<16x64xf32>
    %11 = arith.addf %8, %10 : vector<16x64xf32>
    %c0_15 = arith.constant 0 : index
    %c0_16 = arith.constant 0 : index
    %12 = vector.load %arg6[%c0_15, %c0_16] : memref<32x64xf32, #tpu.memory_space<vmem>>, vector<32x64xf32>
    %cst_17 = arith.constant dense<0.000000e+00> : vector<16x64xf32>
    %13 = tpu.matmul %3, %12, %cst_17 {dimension_numbers = #tpu.dot_dimension_numbers<[1], [0], [0], [1], [0, 0, 1, 1], [], []>} : vector<16x32xf32>, vector<32x64xf32>, vector<16x64xf32> -> vector<16x64xf32>
    %c0_18 = arith.constant 0 : index
    %c0_19 = arith.constant 0 : index
    %14 = vector.load %arg7[%c0_18, %c0_19] : memref<1x64xf32, #tpu.memory_space<vmem>>, vector<1x64xf32>
    %15 = vector.broadcast %14 : vector<1x64xf32> to vector<16x64xf32>
    %16 = arith.addf %13, %15 : vector<16x64xf32>
    %c0_20 = arith.constant 0 : index
    %c0_21 = arith.constant 0 : index
    %17 = vector.load %arg8[%c0_20, %c0_21] : memref<32x64xf32, #tpu.memory_space<vmem>>, vector<32x64xf32>
    %cst_22 = arith.constant dense<0.000000e+00> : vector<16x64xf32>
    %18 = tpu.matmul %5, %17, %cst_22 {dimension_numbers = #tpu.dot_dimension_numbers<[1], [0], [0], [1], [0, 0, 1, 1], [], []>} : vector<16x32xf32>, vector<32x64xf32>, vector<16x64xf32> -> vector<16x64xf32>
    %c0_23 = arith.constant 0 : index
    %c0_24 = arith.constant 0 : index
    %19 = vector.load %arg9[%c0_23, %c0_24] : memref<1x64xf32, #tpu.memory_space<vmem>>, vector<1x64xf32>
    %20 = vector.broadcast %19 : vector<1x64xf32> to vector<16x64xf32>
    %21 = arith.addf %18, %20 : vector<16x64xf32>
    %22 = vector.extract_strided_slice %11 {offsets = [0, 0], sizes = [16, 16], strides = [1, 1]} : vector<16x64xf32> to vector<16x16xf32>
    %23 = vector.shape_cast %22 : vector<16x16xf32> to vector<2x8x16xf32>
    %24 = vector.extract_strided_slice %16 {offsets = [0, 0], sizes = [16, 16], strides = [1, 1]} : vector<16x64xf32> to vector<16x16xf32>
    %25 = vector.shape_cast %24 : vector<16x16xf32> to vector<2x8x16xf32>
    %26 = vector.extract_strided_slice %21 {offsets = [0, 0], sizes = [16, 16], strides = [1, 1]} : vector<16x64xf32> to vector<16x16xf32>
    %27 = vector.shape_cast %26 : vector<16x16xf32> to vector<2x8x16xf32>
    "tpu.trace_start"() <{level = 10 : i32, message = "bqd,bkd->bqk"}> : () -> ()
    %cst_25 = arith.constant dense<0.000000e+00> : vector<2x8x8xf32>
    %28 = tpu.matmul %23, %25, %cst_25 {dimension_numbers = #tpu.dot_dimension_numbers<[2], [2], [1], [1], [0, 0, 0, 1, 1, 1], [0], [0]>} : vector<2x8x16xf32>, vector<2x8x16xf32>, vector<2x8x8xf32> -> vector<2x8x8xf32>
    %c0_i32 = arith.constant 0 : i32
    "tpu.trace_stop"() : () -> ()
    %29 = vector.broadcast %c0_i32 : i32 to vector<2x8x8xi32>
    %30 = arith.cmpi ne, %6, %29 : vector<2x8x8xi32>
    %cst_26 = arith.constant -1.000000e+09 : f32
    %31 = vector.broadcast %cst_26 : f32 to vector<2x8x8xf32>
    %32 = arith.select %30, %31, %28 : vector<2x8x8xi1>, vector<2x8x8xf32>
    %cst_27 = arith.constant dense<0xFF800000> : vector<2x8xf32>
    %33 = vector.multi_reduction <maximumf>, %32, %cst_27 [2] : vector<2x8x8xf32> to vector<2x8xf32>
    %34 = vector.shape_cast %33 : vector<2x8xf32> to vector<2x8x1xf32>
    %35 = vector.broadcast %34 : vector<2x8x1xf32> to vector<2x8x8xf32>
    %36 = arith.subf %32, %35 : vector<2x8x8xf32>
    %37 = math.exp %36 : vector<2x8x8xf32>
    %cst_28 = arith.constant dense<0.000000e+00> : vector<2x8xf32>
    %38 = vector.multi_reduction <add>, %37, %cst_28 [2] : vector<2x8x8xf32> to vector<2x8xf32>
    %39 = vector.shape_cast %38 : vector<2x8xf32> to vector<2x8x1xf32>
    %40 = tpu.reciprocal %39 {approx = true} : vector<2x8x1xf32> -> vector<2x8x1xf32>
    %41 = vector.broadcast %40 : vector<2x8x1xf32> to vector<2x8x8xf32>
    %42 = arith.mulf %37, %41 : vector<2x8x8xf32>
    %c0_29 = arith.constant 0 : index
    %c0_30 = arith.constant 0 : index
    %c0_31 = arith.constant 0 : index
    %c0_32 = arith.constant 0 : index
    %43 = vector.load %arg15[%c0_29, %c0_30, %c0_31, %c0_32] : memref<2x4x8x8xf32, #tpu.memory_space<vmem>>, vector<2x1x8x8xf32>
    %44 = vector.shape_cast %43 : vector<2x1x8x8xf32> to vector<2x8x8xf32>
    %45 = vector.shape_cast %42 : vector<2x8x8xf32> to vector<2x1x8x8xf32>
    tpu.vector_store %arg15[%c0_29, %c0_30, %c0_31, %c0_32], %45 {strides = array<i32>} : memref<2x4x8x8xf32, #tpu.memory_space<vmem>>, vector<2x1x8x8xf32>,
    "tpu.trace_start"() <{level = 10 : i32, message = "bqk,bkd->bqd"}> : () -> ()
    %cst_33 = arith.constant dense<0.000000e+00> : vector<2x8x16xf32>
    %46 = tpu.matmul %42, %27, %cst_33 {dimension_numbers = #tpu.dot_dimension_numbers<[2], [1], [1], [2], [0, 0, 0, 1, 1, 2], [0], [0]>} : vector<2x8x8xf32>, vector<2x8x16xf32>, vector<2x8x16xf32> -> vector<2x8x16xf32>
    "tpu.trace_stop"() : () -> ()
    %47 = vector.shape_cast %46 : vector<2x8x16xf32> to vector<16x16xf32>
    %48 = vector.extract_strided_slice %11 {offsets = [0, 16], sizes = [16, 16], strides = [1, 1]} : vector<16x64xf32> to vector<16x16xf32>
    %49 = vector.shape_cast %48 : vector<16x16xf32> to vector<2x8x16xf32>
    %50 = vector.extract_strided_slice %16 {offsets = [0, 16], sizes = [16, 16], strides = [1, 1]} : vector<16x64xf32> to vector<16x16xf32>
    %51 = vector.shape_cast %50 : vector<16x16xf32> to vector<2x8x16xf32>
    %52 = vector.extract_strided_slice %21 {offsets = [0, 16], sizes = [16, 16], strides = [1, 1]} : vector<16x64xf32> to vector<16x16xf32>
    %53 = vector.shape_cast %52 : vector<16x16xf32> to vector<2x8x16xf32>
    "tpu.trace_start"() <{level = 10 : i32, message = "bqd,bkd->bqk"}> : () -> ()
    %cst_34 = arith.constant dense<0.000000e+00> : vector<2x8x8xf32>
    %54 = tpu.matmul %49, %51, %cst_34 {dimension_numbers = #tpu.dot_dimension_numbers<[2], [2], [1], [1], [0, 0, 0, 1, 1, 1], [0], [0]>} : vector<2x8x16xf32>, vector<2x8x16xf32>, vector<2x8x8xf32> -> vector<2x8x8xf32>
    %c0_i32_35 = arith.constant 0 : i32
    "tpu.trace_stop"() : () -> ()
    %55 = vector.broadcast %c0_i32_35 : i32 to vector<2x8x8xi32>
    %56 = arith.cmpi ne, %6, %55 : vector<2x8x8xi32>
    %cst_36 = arith.constant -1.000000e+09 : f32
    %57 = vector.broadcast %cst_36 : f32 to vector<2x8x8xf32>
    %58 = arith.select %56, %57, %54 : vector<2x8x8xi1>, vector<2x8x8xf32>
    %cst_37 = arith.constant dense<0xFF800000> : vector<2x8xf32>
    %59 = vector.multi_reduction <maximumf>, %58, %cst_37 [2] : vector<2x8x8xf32> to vector<2x8xf32>
    %60 = vector.shape_cast %59 : vector<2x8xf32> to vector<2x8x1xf32>
    %61 = vector.broadcast %60 : vector<2x8x1xf32> to vector<2x8x8xf32>
    %62 = arith.subf %58, %61 : vector<2x8x8xf32>
    %63 = math.exp %62 : vector<2x8x8xf32>
    %cst_38 = arith.constant dense<0.000000e+00> : vector<2x8xf32>
    %64 = vector.multi_reduction <add>, %63, %cst_38 [2] : vector<2x8x8xf32> to vector<2x8xf32>
    %65 = vector.shape_cast %64 : vector<2x8xf32> to vector<2x8x1xf32>
    %66 = tpu.reciprocal %65 {approx = true} : vector<2x8x1xf32> -> vector<2x8x1xf32>
    %67 = vector.broadcast %66 : vector<2x8x1xf32> to vector<2x8x8xf32>
    %68 = arith.mulf %63, %67 : vector<2x8x8xf32>
    %c0_39 = arith.constant 0 : index
    %c1 = arith.constant 1 : index
    %c0_40 = arith.constant 0 : index
    %c0_41 = arith.constant 0 : index
    %69 = vector.load %arg15[%c0_39, %c1, %c0_40, %c0_41] : memref<2x4x8x8xf32, #tpu.memory_space<vmem>>, vector<2x1x8x8xf32>
    %70 = vector.shape_cast %69 : vector<2x1x8x8xf32> to vector<2x8x8xf32>
    %71 = vector.shape_cast %68 : vector<2x8x8xf32> to vector<2x1x8x8xf32>
    tpu.vector_store %arg15[%c0_39, %c1, %c0_40, %c0_41], %71 {strides = array<i32>} : memref<2x4x8x8xf32, #tpu.memory_space<vmem>>, vector<2x1x8x8xf32>,
    "tpu.trace_start"() <{level = 10 : i32, message = "bqk,bkd->bqd"}> : () -> ()
    %cst_42 = arith.constant dense<0.000000e+00> : vector<2x8x16xf32>
    %72 = tpu.matmul %68, %53, %cst_42 {dimension_numbers = #tpu.dot_dimension_numbers<[2], [1], [1], [2], [0, 0, 0, 1, 1, 2], [0], [0]>} : vector<2x8x8xf32>, vector<2x8x16xf32>, vector<2x8x16xf32> -> vector<2x8x16xf32>
    "tpu.trace_stop"() : () -> ()
    %73 = vector.shape_cast %72 : vector<2x8x16xf32> to vector<16x16xf32>
    %74 = vector.extract_strided_slice %11 {offsets = [0, 32], sizes = [16, 16], strides = [1, 1]} : vector<16x64xf32> to vector<16x16xf32>
    %75 = vector.shape_cast %74 : vector<16x16xf32> to vector<2x8x16xf32>
    %76 = vector.extract_strided_slice %16 {offsets = [0, 32], sizes = [16, 16], strides = [1, 1]} : vector<16x64xf32> to vector<16x16xf32>
    %77 = vector.shape_cast %76 : vector<16x16xf32> to vector<2x8x16xf32>
    %78 = vector.extract_strided_slice %21 {offsets = [0, 32], sizes = [16, 16], strides = [1, 1]} : vector<16x64xf32> to vector<16x16xf32>
    %79 = vector.shape_cast %78 : vector<16x16xf32> to vector<2x8x16xf32>
    "tpu.trace_start"() <{level = 10 : i32, message = "bqd,bkd->bqk"}> : () -> ()
    %cst_43 = arith.constant dense<0.000000e+00> : vector<2x8x8xf32>
    %80 = tpu.matmul %75, %77, %cst_43 {dimension_numbers = #tpu.dot_dimension_numbers<[2], [2], [1], [1], [0, 0, 0, 1, 1, 1], [0], [0]>} : vector<2x8x16xf32>, vector<2x8x16xf32>, vector<2x8x8xf32> -> vector<2x8x8xf32>
    %c0_i32_44 = arith.constant 0 : i32
    "tpu.trace_stop"() : () -> ()
    %81 = vector.broadcast %c0_i32_44 : i32 to vector<2x8x8xi32>
    %82 = arith.cmpi ne, %6, %81 : vector<2x8x8xi32>
    %cst_45 = arith.constant -1.000000e+09 : f32
    %83 = vector.broadcast %cst_45 : f32 to vector<2x8x8xf32>
    %84 = arith.select %82, %83, %80 : vector<2x8x8xi1>, vector<2x8x8xf32>
    %cst_46 = arith.constant dense<0xFF800000> : vector<2x8xf32>
    %85 = vector.multi_reduction <maximumf>, %84, %cst_46 [2] : vector<2x8x8xf32> to vector<2x8xf32>
    %86 = vector.shape_cast %85 : vector<2x8xf32> to vector<2x8x1xf32>
    %87 = vector.broadcast %86 : vector<2x8x1xf32> to vector<2x8x8xf32>
    %88 = arith.subf %84, %87 : vector<2x8x8xf32>
    %89 = math.exp %88 : vector<2x8x8xf32>
    %cst_47 = arith.constant dense<0.000000e+00> : vector<2x8xf32>
    %90 = vector.multi_reduction <add>, %89, %cst_47 [2] : vector<2x8x8xf32> to vector<2x8xf32>
    %91 = vector.shape_cast %90 : vector<2x8xf32> to vector<2x8x1xf32>
    %92 = tpu.reciprocal %91 {approx = true} : vector<2x8x1xf32> -> vector<2x8x1xf32>
    %93 = vector.broadcast %92 : vector<2x8x1xf32> to vector<2x8x8xf32>
    %94 = arith.mulf %89, %93 : vector<2x8x8xf32>
    %c0_48 = arith.constant 0 : index
    %c2 = arith.constant 2 : index
    %c0_49 = arith.constant 0 : index
    %c0_50 = arith.constant 0 : index
    %95 = vector.load %arg15[%c0_48, %c2, %c0_49, %c0_50] : memref<2x4x8x8xf32, #tpu.memory_space<vmem>>, vector<2x1x8x8xf32>
    %96 = vector.shape_cast %95 : vector<2x1x8x8xf32> to vector<2x8x8xf32>
    %97 = vector.shape_cast %94 : vector<2x8x8xf32> to vector<2x1x8x8xf32>
    tpu.vector_store %arg15[%c0_48, %c2, %c0_49, %c0_50], %97 {strides = array<i32>} : memref<2x4x8x8xf32, #tpu.memory_space<vmem>>, vector<2x1x8x8xf32>,
    "tpu.trace_start"() <{level = 10 : i32, message = "bqk,bkd->bqd"}> : () -> ()
    %cst_51 = arith.constant dense<0.000000e+00> : vector<2x8x16xf32>
    %98 = tpu.matmul %94, %79, %cst_51 {dimension_numbers = #tpu.dot_dimension_numbers<[2], [1], [1], [2], [0, 0, 0, 1, 1, 2], [0], [0]>} : vector<2x8x8xf32>, vector<2x8x16xf32>, vector<2x8x16xf32> -> vector<2x8x16xf32>
    "tpu.trace_stop"() : () -> ()
    %99 = vector.shape_cast %98 : vector<2x8x16xf32> to vector<16x16xf32>
    %100 = vector.extract_strided_slice %11 {offsets = [0, 48], sizes = [16, 16], strides = [1, 1]} : vector<16x64xf32> to vector<16x16xf32>
    %101 = vector.shape_cast %100 : vector<16x16xf32> to vector<2x8x16xf32>
    %102 = vector.extract_strided_slice %16 {offsets = [0, 48], sizes = [16, 16], strides = [1, 1]} : vector<16x64xf32> to vector<16x16xf32>
    %103 = vector.shape_cast %102 : vector<16x16xf32> to vector<2x8x16xf32>
    %104 = vector.extract_strided_slice %21 {offsets = [0, 48], sizes = [16, 16], strides = [1, 1]} : vector<16x64xf32> to vector<16x16xf32>
    %105 = vector.shape_cast %104 : vector<16x16xf32> to vector<2x8x16xf32>
    "tpu.trace_start"() <{level = 10 : i32, message = "bqd,bkd->bqk"}> : () -> ()
    %cst_52 = arith.constant dense<0.000000e+00> : vector<2x8x8xf32>
    %106 = tpu.matmul %101, %103, %cst_52 {dimension_numbers = #tpu.dot_dimension_numbers<[2], [2], [1], [1], [0, 0, 0, 1, 1, 1], [0], [0]>} : vector<2x8x16xf32>, vector<2x8x16xf32>, vector<2x8x8xf32> -> vector<2x8x8xf32>
    %c0_i32_53 = arith.constant 0 : i32
    "tpu.trace_stop"() : () -> ()
    %107 = vector.broadcast %c0_i32_53 : i32 to vector<2x8x8xi32>
    %108 = arith.cmpi ne, %6, %107 : vector<2x8x8xi32>
    %cst_54 = arith.constant -1.000000e+09 : f32
    %109 = vector.broadcast %cst_54 : f32 to vector<2x8x8xf32>
    %110 = arith.select %108, %109, %106 : vector<2x8x8xi1>, vector<2x8x8xf32>
    %cst_55 = arith.constant dense<0xFF800000> : vector<2x8xf32>
    %111 = vector.multi_reduction <maximumf>, %110, %cst_55 [2] : vector<2x8x8xf32> to vector<2x8xf32>
    %112 = vector.shape_cast %111 : vector<2x8xf32> to vector<2x8x1xf32>
    %113 = vector.broadcast %112 : vector<2x8x1xf32> to vector<2x8x8xf32>
    %114 = arith.subf %110, %113 : vector<2x8x8xf32>
    %115 = math.exp %114 : vector<2x8x8xf32>
    %cst_56 = arith.constant dense<0.000000e+00> : vector<2x8xf32>
    %116 = vector.multi_reduction <add>, %115, %cst_56 [2] : vector<2x8x8xf32> to vector<2x8xf32>
    %117 = vector.shape_cast %116 : vector<2x8xf32> to vector<2x8x1xf32>
    %118 = tpu.reciprocal %117 {approx = true} : vector<2x8x1xf32> -> vector<2x8x1xf32>
    %119 = vector.broadcast %118 : vector<2x8x1xf32> to vector<2x8x8xf32>
    %120 = arith.mulf %115, %119 : vector<2x8x8xf32>
    %c0_57 = arith.constant 0 : index
    %c3 = arith.constant 3 : index
    %c0_58 = arith.constant 0 : index
    %c0_59 = arith.constant 0 : index
    %121 = vector.load %arg15[%c0_57, %c3, %c0_58, %c0_59] : memref<2x4x8x8xf32, #tpu.memory_space<vmem>>, vector<2x1x8x8xf32>
    %122 = vector.shape_cast %121 : vector<2x1x8x8xf32> to vector<2x8x8xf32>
    %123 = vector.shape_cast %120 : vector<2x8x8xf32> to vector<2x1x8x8xf32>
    tpu.vector_store %arg15[%c0_57, %c3, %c0_58, %c0_59], %123 {strides = array<i32>} : memref<2x4x8x8xf32, #tpu.memory_space<vmem>>, vector<2x1x8x8xf32>,
    "tpu.trace_start"() <{level = 10 : i32, message = "bqk,bkd->bqd"}> : () -> ()
    %cst_60 = arith.constant dense<0.000000e+00> : vector<2x8x16xf32>
    %124 = tpu.matmul %120, %105, %cst_60 {dimension_numbers = #tpu.dot_dimension_numbers<[2], [1], [1], [2], [0, 0, 0, 1, 1, 2], [0], [0]>} : vector<2x8x8xf32>, vector<2x8x16xf32>, vector<2x8x16xf32> -> vector<2x8x16xf32>
    "tpu.trace_stop"() : () -> ()
    %125 = vector.shape_cast %124 : vector<2x8x16xf32> to vector<16x16xf32>
    %126 = tpu.concatenate %47, %73, %99, %125 in 1 : vector<16x16xf32>, vector<16x16xf32>, vector<16x16xf32>, vector<16x16xf32> -> vector<16x64xf32>
    %c0_61 = arith.constant 0 : index
    %c0_62 = arith.constant 0 : index
    %127 = vector.load %arg10[%c0_61, %c0_62] : memref<64x32xf32, #tpu.memory_space<vmem>>, vector<64x32xf32>
    %cst_63 = arith.constant dense<0.000000e+00> : vector<16x32xf32>
    %128 = tpu.matmul %126, %127, %cst_63 {dimension_numbers = #tpu.dot_dimension_numbers<[1], [0], [0], [1], [0, 0, 1, 1], [], []>} : vector<16x64xf32>, vector<64x32xf32>, vector<16x32xf32> -> vector<16x32xf32>
    %c0_64 = arith.constant 0 : index
    %c0_65 = arith.constant 0 : index
    %129 = vector.load %arg11[%c0_64, %c0_65] : memref<1x32xf32, #tpu.memory_space<vmem>>, vector<1x32xf32>
    %130 = vector.broadcast %129 : vector<1x32xf32> to vector<16x32xf32>
    %131 = arith.addf %128, %130 : vector<16x32xf32>
    %132 = arith.addf %131, %1 : vector<16x32xf32>
    %cst_66 = arith.constant dense<0.000000e+00> : vector<16xf32>
    %133 = vector.multi_reduction <add>, %132, %cst_66 [1] : vector<16x32xf32> to vector<16xf32>
    %134 = vector.shape_cast %133 : vector<16xf32> to vector<16x1xf32>
    %cst_67 = arith.constant 3.200000e+01 : f32
    %135 = vector.broadcast %cst_67 : f32 to vector<16x1xf32>
    %136 = arith.divf %134, %135 : vector<16x1xf32>
    %137 = vector.broadcast %136 : vector<16x1xf32> to vector<16x32xf32>
    %138 = arith.subf %132, %137 : vector<16x32xf32>
    %139 = arith.mulf %138, %138 : vector<16x32xf32>
    %cst_68 = arith.constant dense<0.000000e+00> : vector<16xf32>
    %140 = vector.multi_reduction <add>, %139, %cst_68 [1] : vector<16x32xf32> to vector<16xf32>
    %141 = vector.shape_cast %140 : vector<16xf32> to vector<16x1xf32>
    %cst_69 = arith.constant 3.200000e+01 : f32
    %142 = vector.broadcast %cst_69 : f32 to vector<16x1xf32>
    %143 = arith.divf %141, %142 : vector<16x1xf32>
    %cst_70 = arith.constant 9.99999974E-6 : f32
    %144 = vector.broadcast %cst_70 : f32 to vector<16x1xf32>
    %145 = arith.addf %143, %144 : vector<16x1xf32>
    %146 = math.rsqrt %145 : vector<16x1xf32>
    %147 = vector.broadcast %146 : vector<16x1xf32> to vector<16x32xf32>
    %148 = arith.mulf %138, %147 : vector<16x32xf32>
    %c0_71 = arith.constant 0 : index
    %c0_72 = arith.constant 0 : index
    %149 = vector.load %arg12[%c0_71, %c0_72] : memref<1x32xf32, #tpu.memory_space<vmem>>, vector<1x32xf32>
    %150 = vector.broadcast %149 : vector<1x32xf32> to vector<16x32xf32>
    %151 = arith.mulf %148, %150 : vector<16x32xf32>
    %c0_73 = arith.constant 0 : index
    %c0_74 = arith.constant 0 : index
    %152 = vector.load %arg13[%c0_73, %c0_74] : memref<1x32xf32, #tpu.memory_space<vmem>>, vector<1x32xf32>
    %153 = vector.broadcast %152 : vector<1x32xf32> to vector<16x32xf32>
    %154 = arith.addf %151, %153 : vector<16x32xf32>
    %155 = vector.shape_cast %154 : vector<16x32xf32> to vector<2x8x32xf32>
    %c0_75 = arith.constant 0 : index
    %c0_76 = arith.constant 0 : index
    %c0_77 = arith.constant 0 : index
    %156 = vector.load %arg14[%c0_75, %c0_76, %c0_77] : memref<2x8x32xf32, #tpu.memory_space<vmem>>, vector<2x8x32xf32>
    tpu.vector_store %arg14[%c0_75, %c0_76, %c0_77], %155 {strides = array<i32>} : memref<2x8x32xf32, #tpu.memory_space<vmem>>, vector<2x8x32xf32>,
    return
  }
}

</mosaic_0001>

<llo_original>
// kernel: multi_head_attention.1
$region0: #{multi_head_attention.1}
  #allocation0 [shape = 'u32[]', space=smem, size = 0x4, offset = 0x4, fixed_abs, tag = 'smem constant byte address 0x4 - core index']
  #allocation1 [shape = 'u32[72,128]{1,0:T(1,128)}', space=vmem, size = 0x9000, scoped, tag = 'internal scratch']
  %s0 = inlined_call_operand.vmem [shape: f32[2,8,32], index: 0, kind: input, shape index: {}]
  %s1 = inlined_call_operand.hbm [shape: f32[2,8,32], index: 1, kind: input, shape index: {}]
  %s2 = inlined_call_operand.hbm [shape: f32[2,8,32], index: 2, kind: input, shape index: {}]
  %s3 = inlined_call_operand.vmem [shape: s32[2,8,8], index: 3, kind: input, shape index: {}]
  %s4 = inlined_call_operand.vmem [shape: f32[32,64], index: 4, kind: input, shape index: {}]
  %s5 = inlined_call_operand.vmem [shape: f32[1,64], index: 5, kind: input, shape index: {}]
  %s6 = inlined_call_operand.vmem [shape: f32[32,64], index: 6, kind: input, shape index: {}]
  %s7 = inlined_call_operand.vmem [shape: f32[1,64], index: 7, kind: input, shape index: {}]
  %s8 = inlined_call_operand.vmem [shape: f32[32,64], index: 8, kind: input, shape index: {}]
  %s9 = inlined_call_operand.vmem [shape: f32[1,64], index: 9, kind: input, shape index: {}]
  %s10 = inlined_call_operand.vmem [shape: f32[64,32], index: 10, kind: input, shape index: {}]
  %s11 = inlined_call_operand.vmem [shape: f32[1,32], index: 11, kind: input, shape index: {}]
  %s12 = inlined_call_operand.vmem [shape: f32[1,32], index: 12, kind: input, shape index: {}]
  %s13 = inlined_call_operand.vmem [shape: f32[1,32], index: 13, kind: input, shape index: {}]
  %s14 = inlined_call_operand.hbm [shape: f32[2,8,32], index: 14, kind: output, shape index: {0}]
  %s15 = inlined_call_operand.hbm [shape: f32[2,4,8,8], index: 15, kind: output, shape index: {1}]
  %16 = xla_tuple %s14, %s15
  %s17 = sld [smem:[#allocation0]]
  $region82: #{multi_head_attention.1} parent=0
    _
  %s19 = ssub.s32 1, %s17
  %s20 = scalar_select 0, %s19, %s17
  $region1: #{multi_head_attention.1} parent=0
    #allocation2 [shape = 'u8[8192]{0}', space=vmem, size = 0x2000, scoped, tag = 'input window, operand 1, single buffered']
    #allocation3 [shape = 's32[1]{0}', space=sflag, size = 0x4, scoped, tag = 'scoped memory for multi_head_attention.1']
    #allocation4 [shape = 's32[1]{0}', space=sflag, size = 0x4, scoped, tag = 'scoped memory for multi_head_attention.1']
    #allocation5 [shape = 'u8[8192]{0}', space=vmem, size = 0x2000, scoped, tag = 'input window, operand 2, single buffered']
    #allocation6 [shape = 's32[1]{0}', space=sflag, size = 0x4, scoped, tag = 'scoped memory for multi_head_attention.1']
    #allocation7 [shape = 'u8[8192]{0}', space=vmem, size = 0x2000, scoped, tag = 'output window, operand 0, single buffered']
    #allocation8 [shape = 'u8[32768]{0}', space=vmem, size = 0x8000, scoped, tag = 'output window, operand 1, single buffered']
    #allocation9 [shape = 's32[1]{0}', space=sflag, size = 0x4, scoped, tag = 'scoped memory for multi_head_attention.1']
    %21 = vsyncpa [#allocation3], 0
    %22 = vsyncpa [#allocation6], 0
    %23 = vsyncpa [#allocation4], 0
    %24 = vsyncpa [#allocation9], 0
    // Predicated region
    $region2: #{multi_head_attention.1} parent=1 // pred_check
      _
    $region3: #{multi_head_attention.1} parent=1 // pred_check_branch
      %26 = sbr.rel (0) target = $region5
    $region4: #{multi_head_attention.1} parent=1 // pred_region
      _
    $region5: #{multi_head_attention.1} parent=1 // pred_fallthru
      _
    // Predicated region
    $region6: #{multi_head_attention.1} parent=1 // pred_check
      _
    $region7: #{multi_head_attention.1} parent=1 // pred_check_branch
      %28 = sbr.rel (0) target = $region9
    $region8: #{multi_head_attention.1} parent=1 // pred_region
      %30 = vsyncadd [#allocation3], 0
      %s31 = sshll.u32 %s1, 4
      %s32 = int_to_ptr.hbm [resolvable:$true] %s31
      %s33 = sshll.u32 [#allocation2], 4
      %s34 = int_to_ptr.vmem [resolvable:$true] %s33
      %39 = dma.hbm_to_vmem [thread:$0]  %s32, 256, %s34, [#allocation3], 128, 128, 8
    $region9: #{multi_head_attention.1} parent=1 // pred_fallthru
      _
    // Predicated region
    $region10: #{multi_head_attention.1} parent=1 // pred_check
      _
    $region11: #{multi_head_attention.1} parent=1 // pred_check_branch
      %41 = sbr.rel (0) target = $region13
    $region12: #{multi_head_attention.1} parent=1 // pred_region
      %43 = vsyncadd [#allocation6], 0
      %s44 = sshll.u32 %s2, 4
      %s45 = int_to_ptr.hbm [resolvable:$true] %s44
      %s46 = sshll.u32 [#allocation5], 4
      %s47 = int_to_ptr.vmem [resolvable:$true] %s46
      %52 = dma.hbm_to_vmem [thread:$0]  %s45, 256, %s47, [#allocation6], 128, 128, 8
    $region13: #{multi_head_attention.1} parent=1 // pred_fallthru
      _
    // Predicated region
    $region14: #{multi_head_attention.1} parent=1 // pred_check
      _
    $region15: #{multi_head_attention.1} parent=1 // pred_check_branch
      %54 = sbr.rel (0) target = $region17
    $region16: #{multi_head_attention.1} parent=1 // pred_region
      _
    $region17: #{multi_head_attention.1} parent=1 // pred_fallthru
      _
    // Predicated region
    $region18: #{multi_head_attention.1} parent=1 // pred_check
      _
    $region19: #{multi_head_attention.1} parent=1 // pred_check_branch
      %56 = sbr.rel (0) target = $region21
    $region20: #{multi_head_attention.1} parent=1 // pred_region
      _
    $region21: #{multi_head_attention.1} parent=1 // pred_fallthru
      _
    // Predicated region
    $region22: #{multi_head_attention.1} parent=1 // pred_check
      _
    $region23: #{multi_head_attention.1} parent=1 // pred_check_branch
      %58 = sbr.rel (0) target = $region25
    $region24: #{multi_head_attention.1} parent=1 // pred_region
      _
    $region25: #{multi_head_attention.1} parent=1 // pred_fallthru
      _
    // Predicated region
    $region26: #{multi_head_attention.1} parent=1 // pred_check
      _
    $region27: #{multi_head_attention.1} parent=1 // pred_check_branch
      %60 = sbr.rel (0) target = $region29
    $region28: #{multi_head_attention.1} parent=1 // pred_region
      _
    $region29: #{multi_head_attention.1} parent=1 // pred_fallthru
      _
    // Predicated region
    $region30: #{multi_head_attention.1} parent=1 // pred_check
      _
    $region31: #{multi_head_attention.1} parent=1 // pred_check_branch
      %62 = sbr.rel (0) target = $region33
    $region32: #{multi_head_attention.1} parent=1 // pred_region
      _
    $region33: #{multi_head_attention.1} parent=1 // pred_fallthru
      _
    // Predicated region
    $region34: #{multi_head_attention.1} parent=1 // pred_check
      _
    $region35: #{multi_head_attention.1} parent=1 // pred_check_branch
      %64 = sbr.rel (0) target = $region37
    $region36: #{multi_head_attention.1} parent=1 // pred_region
      _
    $region37: #{multi_head_attention.1} parent=1 // pred_fallthru
      _
    // Predicated region
    $region38: #{multi_head_attention.1} parent=1 // pred_check
      _
    $region39: #{multi_head_attention.1} parent=1 // pred_check_branch
      %66 = sbr.rel (0) target = $region41
    $region40: #{multi_head_attention.1} parent=1 // pred_region
      _
    $region41: #{multi_head_attention.1} parent=1 // pred_fallthru
      _
    // Predicated region
    $region42: #{multi_head_attention.1} parent=1 // pred_check
      _
    $region43: #{multi_head_attention.1} parent=1 // pred_check_branch
      %68 = sbr.rel (0) target = $region45
    $region44: #{multi_head_attention.1} parent=1 // pred_region
      _
    $region45: #{multi_head_attention.1} parent=1 // pred_fallthru
      _
    // Predicated region
    $region46: #{multi_head_attention.1} parent=1 // pred_check
      _
    $region47: #{multi_head_attention.1} parent=1 // pred_check_branch
      %70 = sbr.rel (0) target = $region49
    $region48: #{multi_head_attention.1} parent=1 // pred_region
      _
    $region49: #{multi_head_attention.1} parent=1 // pred_fallthru
      _
    // Predicated region
    $region50: #{multi_head_attention.1} parent=1 // pred_check
      _
    $region51: #{multi_head_attention.1} parent=1 // pred_check_branch
      %72 = sbr.rel (0) target = $region53
    $region52: #{multi_head_attention.1} parent=1 // pred_region
      _
    $region53: #{multi_head_attention.1} parent=1 // pred_fallthru
      _
    // Predicated region
    $region54: #{multi_head_attention.1} parent=1 // pred_check
      _
    $region55: #{multi_head_attention.1} parent=1 // pred_check_branch
      %74 = sbr.rel (0) target = $region57
    $region56: #{multi_head_attention.1} parent=1 // pred_region
      _
    $region57: #{multi_head_attention.1} parent=1 // pred_fallthru
      _
    // Predicated region
    $region58: #{multi_head_attention.1} parent=1 // pred_check
      _
    $region59: #{multi_head_attention.1} parent=1 // pred_check_branch
      %76 = sbr.rel (0) target = $region61
    $region60: #{multi_head_attention.1} parent=1 // pred_region
      %78 = dma.done [#allocation3], 256
    $region61: #{multi_head_attention.1} parent=1 // pred_fallthru
      _
    // Predicated region
    $region62: #{multi_head_attention.1} parent=1 // pred_check
      _
    $region63: #{multi_head_attention.1} parent=1 // pred_check_branch
      %80 = sbr.rel (0) target = $region65
    $region64: #{multi_head_attention.1} parent=1 // pred_region
      %82 = dma.done [#allocation6], 256
    $region65: #{multi_head_attention.1} parent=1 // pred_fallthru
      _
    %v83 = vld [vmem:[%s0] sm:$0xff]
    %v84 = vld [vmem:[%s0 + $0x8] sm:$0xff]
    %v85 = vld [vmem:[#allocation2] sm:$0xff]
    %v86 = vld [vmem:[#allocation2 + $0x8] sm:$0xff]
    %v87 = vld [vmem:[#allocation5] sm:$0xff]
    %v88 = vld [vmem:[#allocation5 + $0x8] sm:$0xff]
    %v89 = vld [vmem:[%s3] sm:$0xff]
    %v90 = vld [vmem:[%s3 + $0x8] sm:$0xff]
    %v91 = vld [vmem:[%s4] sm:$0xff]
    %v92 = vld [vmem:[%s4 + $0x8] sm:$0xff]
    %v93 = vld [vmem:[%s4 + $0x10] sm:$0xff]
    %v94 = vld [vmem:[%s4 + $0x18] sm:$0xff]
    %v95 = vld [vmem:[%s5] sm:$0x1]
    %v97 = vperm.slane %v95, 0
    %vm99 = vcmask 261120
    %v101 = vsel %vm99, %v83, 0
    %v104 = vsel %vm99, %v84, 0
    %106 = vmatpush.msra.mxu0 0.0
    %107 = vmatpush.msra.mxu0 0.0
    %108 = vmatpush.msra.mxu0 0.0
    %109 = vmatpush.msra.mxu0 0.0
    %110 = vmatpush.msra.mxu0 0.0
    %111 = vmatpush.msra.mxu0 0.0
    %112 = vmatpush.msra.mxu0 0.0
    %113 = vmatpush.msra.mxu0 0.0
    %114 = vmatpush.msra.mxu0 0.0
    %115 = vmatpush.msra.mxu0 0.0
    %116 = vmatpush.msra.mxu0 0.0
    %117 = vmatpush.msra.mxu0 0.0
    %118 = vmatpush.msra.mxu0 %v94
    %119 = vmatpush.msra.mxu0 %v93
    %120 = vmatpush.msra.mxu0 %v92
    %121 = vmatpush.msra.mxu0 %v91
    %122 = vmatmul.f32.gmra.mxu0 %v101
    %v123 = vpop.f32.mrf.mxu0
    %v124 = vadd.f32 %v97, %v123
    %125 = vmatmul.f32.gmra.mxu0 %v104
    %v126 = vpop.f32.mrf.mxu0
    %v127 = vadd.f32 %v97, %v126
    %128 = vdwg.mxu0
    %v129 = vld [vmem:[%s6] sm:$0xff]
    %v130 = vld [vmem:[%s6 + $0x8] sm:$0xff]
    %v131 = vld [vmem:[%s6 + $0x10] sm:$0xff]
    %v132 = vld [vmem:[%s6 + $0x18] sm:$0xff]
    %v133 = vld [vmem:[%s7] sm:$0x1]
    %v135 = vperm.slane %v133, 0
    %v138 = vsel %vm99, %v85, 0
    %v141 = vsel %vm99, %v86, 0
    %143 = vmatpush.msra.mxu0 0.0
    %144 = vmatpush.msra.mxu0 0.0
    %145 = vmatpush.msra.mxu0 0.0
    %146 = vmatpush.msra.mxu0 0.0
    %147 = vmatpush.msra.mxu0 0.0
    %148 = vmatpush.msra.mxu0 0.0
    %149 = vmatpush.msra.mxu0 0.0
    %150 = vmatpush.msra.mxu0 0.0
    %151 = vmatpush.msra.mxu0 0.0
    %152 = vmatpush.msra.mxu0 0.0
    %153 = vmatpush.msra.mxu0 0.0
    %154 = vmatpush.msra.mxu0 0.0
    %155 = vmatpush.msra.mxu0 %v132
    %156 = vmatpush.msra.mxu0 %v131
    %157 = vmatpush.msra.mxu0 %v130
    %158 = vmatpush.msra.mxu0 %v129
    %159 = vmatmul.f32.gmra.mxu0 %v138
    %v160 = vpop.f32.mrf.mxu0
    %v161 = vadd.f32 %v135, %v160
    %162 = vmatmul.f32.gmra.mxu0 %v141
    %v163 = vpop.f32.mrf.mxu0
    %v164 = vadd.f32 %v135, %v163
    %165 = vdwg.mxu0
    %v166 = vld [vmem:[%s8] sm:$0xff]
    %v167 = vld [vmem:[%s8 + $0x8] sm:$0xff]
    %v168 = vld [vmem:[%s8 + $0x10] sm:$0xff]
    %v169 = vld [vmem:[%s8 + $0x18] sm:$0xff]
    %v170 = vld [vmem:[%s9] sm:$0x1]
    %v172 = vperm.slane %v170, 0
    %v175 = vsel %vm99, %v87, 0
    %v178 = vsel %vm99, %v88, 0
    %180 = vmatpush.msra.mxu0 0.0
    %181 = vmatpush.msra.mxu0 0.0
    %182 = vmatpush.msra.mxu0 0.0
    %183 = vmatpush.msra.mxu0 0.0
    %184 = vmatpush.msra.mxu0 0.0
    %185 = vmatpush.msra.mxu0 0.0
    %186 = vmatpush.msra.mxu0 0.0
    %187 = vmatpush.msra.mxu0 0.0
    %188 = vmatpush.msra.mxu0 0.0
    %189 = vmatpush.msra.mxu0 0.0
    %190 = vmatpush.msra.mxu0 0.0
    %191 = vmatpush.msra.mxu0 0.0
    %192 = vmatpush.msra.mxu0 %v169
    %193 = vmatpush.msra.mxu0 %v168
    %194 = vmatpush.msra.mxu0 %v167
    %195 = vmatpush.msra.mxu0 %v166
    %196 = vmatmul.f32.gmra.mxu0 %v175
    %v197 = vpop.f32.mrf.mxu0
    %v198 = vadd.f32 %v172, %v197
    %199 = vmatmul.f32.gmra.mxu0 %v178
    %v200 = vpop.f32.mrf.mxu0
    %v201 = vadd.f32 %v172, %v200
    %202 = vdwg.mxu0
    %vm203 = vcmask 130048
    %v205 = vsel %vm203, %v124, 0
    %v208 = vsel %vm203, %v161, 0
    %210 = vmatpush.xpose.msra.mxu0 0.0
    %211 = vmatpush.xpose.msra.mxu0 0.0
    %212 = vmatpush.xpose.msra.mxu0 0.0
    %213 = vmatpush.xpose.msra.mxu0 0.0
    %214 = vmatpush.xpose.msra.mxu0 0.0
    %215 = vmatpush.xpose.msra.mxu0 0.0
    %216 = vmatpush.xpose.msra.mxu0 0.0
    %217 = vmatpush.xpose.msra.mxu0 0.0
    %218 = vmatpush.xpose.msra.mxu0 0.0
    %219 = vmatpush.xpose.msra.mxu0 0.0
    %220 = vmatpush.xpose.msra.mxu0 0.0
    %221 = vmatpush.xpose.msra.mxu0 0.0
    %222 = vmatpush.xpose.msra.mxu0 0.0
    %223 = vmatpush.xpose.msra.mxu0 0.0
    %224 = vmatpush.xpose.msra.mxu0 0.0
    %225 = vmatpush.xpose.msra.mxu0 %v208
    %226 = vmatmul.f32.gmra.mxu0 %v205
    %v227 = vpop.f32.mrf.mxu0
    %v228 = vadd.f32 0.0, %v227
    %229 = vdwg.mxu0
    %v231 = vsel %vm203, %v127, 0
    %v234 = vsel %vm203, %v164, 0
    %236 = vmatpush.xpose.msra.mxu0 0.0
    %237 = vmatpush.xpose.msra.mxu0 0.0
    %238 = vmatpush.xpose.msra.mxu0 0.0
    %239 = vmatpush.xpose.msra.mxu0 0.0
    %240 = vmatpush.xpose.msra.mxu0 0.0
    %241 = vmatpush.xpose.msra.mxu0 0.0
    %242 = vmatpush.xpose.msra.mxu0 0.0
    %243 = vmatpush.xpose.msra.mxu0 0.0
    %244 = vmatpush.xpose.msra.mxu0 0.0
    %245 = vmatpush.xpose.msra.mxu0 0.0
    %246 = vmatpush.xpose.msra.mxu0 0.0
    %247 = vmatpush.xpose.msra.mxu0 0.0
    %248 = vmatpush.xpose.msra.mxu0 0.0
    %249 = vmatpush.xpose.msra.mxu0 0.0
    %250 = vmatpush.xpose.msra.mxu0 0.0
    %251 = vmatpush.xpose.msra.mxu0 %v234
    %252 = vmatmul.f32.gmra.mxu0 %v231
    %v253 = vpop.f32.mrf.mxu0
    %v254 = vadd.f32 0.0, %v253
    %255 = vdwg.mxu0
    %vm256 = vcmp.ne.s32.totalorder %v89, 0
    %vm257 = vcmp.ne.s32.totalorder %v90, 0
    %v258 = vsel %vm256, -1e+09, %v228
    %v259 = vsel %vm257, -1e+09, %v254
    %vm260 = vcmask 64512
    %v261 = vsel %vm260, %v258, -inf
    %262 = vmax.xlane.f32.xlu0 %v261
    %v263 = vpop.xlane.xlu0 %262
    %v264 = vsel %vm260, %v259, -inf
    %265 = vmax.xlane.f32.xlu0 %v264
    %v266 = vpop.xlane.xlu0 %265
    %v267 = vsub.f32 %v258, %v263
    %v268 = vsub.f32 %v259, %v266
    %v269 = vmul.f32 %v267, 1.442695
    %v270 = vpow.pop %v269
    %v271 = vmul.f32 %v268, 1.442695
    %v272 = vpow.pop %v271
    %v273 = vsel %vm260, %v270, 0.0
    %274 = vadd.xlane.f32.xlu0 %v273
    %v275 = vpop.xlane.xlu0 %274
    %v276 = vsel %vm260, %v272, 0.0
    %277 = vadd.xlane.f32.xlu0 %v276
    %v278 = vpop.xlane.xlu0 %277
    %v279 = vrcp.pop %v275
    %v280 = vrcp.pop %v278
    %v281 = vmul.f32 %v270, %v279
    %v282 = vmul.f32 %v272, %v280
    %283 = vst.msk [vmem:[#allocation8] sm:$0xff] %vm260, %v281
    %284 = vst.msk [vmem:[#allocation8 + $0x20] sm:$0xff] %vm260, %v282
    %v286 = vsel %vm260, %v281, 0
    %288 = vmatpush.msra.mxu0 0.0
    %289 = vmatpush.msra.mxu0 0.0
    %290 = vmatpush.msra.mxu0 0.0
    %291 = vmatpush.msra.mxu0 0.0
    %292 = vmatpush.msra.mxu0 0.0
    %293 = vmatpush.msra.mxu0 0.0
    %294 = vmatpush.msra.mxu0 0.0
    %295 = vmatpush.msra.mxu0 0.0
    %296 = vmatpush.msra.mxu0 0.0
    %297 = vmatpush.msra.mxu0 0.0
    %298 = vmatpush.msra.mxu0 0.0
    %299 = vmatpush.msra.mxu0 0.0
    %300 = vmatpush.msra.mxu0 0.0
    %301 = vmatpush.msra.mxu0 0.0
    %302 = vmatpush.msra.mxu0 0.0
    %303 = vmatpush.msra.mxu0 %v198
    %304 = vmatmul.f32.gmra.mxu0 %v286
    %v305 = vpop.f32.mrf.mxu0
    %v306 = vadd.f32 0.0, %v305
    %307 = vdwg.mxu0
    %v309 = vsel %vm260, %v282, 0
    %311 = vmatpush.msra.mxu0 0.0
    %312 = vmatpush.msra.mxu0 0.0
    %313 = vmatpush.msra.mxu0 0.0
    %314 = vmatpush.msra.mxu0 0.0
    %315 = vmatpush.msra.mxu0 0.0
    %316 = vmatpush.msra.mxu0 0.0
    %317 = vmatpush.msra.mxu0 0.0
    %318 = vmatpush.msra.mxu0 0.0
    %319 = vmatpush.msra.mxu0 0.0
    %320 = vmatpush.msra.mxu0 0.0
    %321 = vmatpush.msra.mxu0 0.0
    %322 = vmatpush.msra.mxu0 0.0
    %323 = vmatpush.msra.mxu0 0.0
    %324 = vmatpush.msra.mxu0 0.0
    %325 = vmatpush.msra.mxu0 0.0
    %326 = vmatpush.msra.mxu0 %v201
    %327 = vmatmul.f32.gmra.mxu0 %v309
    %v328 = vpop.f32.mrf.mxu0
    %v329 = vadd.f32 0.0, %v328
    %330 = vdwg.mxu0
    %331 = vrot.lane.b32.xlu0 %v124, 112
    %v332 = vpop.permute.xlu0 %331
    %333 = vrot.lane.b32.xlu0 %v161, 112
    %v334 = vpop.permute.xlu0 %333
    %v335 = vsel %vm203, %v332, 0
    %v337 = vsel %vm203, %v334, 0
    %339 = vmatpush.xpose.msra.mxu0 0.0
    %340 = vmatpush.xpose.msra.mxu0 0.0
    %341 = vmatpush.xpose.msra.mxu0 0.0
    %342 = vmatpush.xpose.msra.mxu0 0.0
    %343 = vmatpush.xpose.msra.mxu0 0.0
    %344 = vmatpush.xpose.msra.mxu0 0.0
    %345 = vmatpush.xpose.msra.mxu0 0.0
    %346 = vmatpush.xpose.msra.mxu0 0.0
    %347 = vmatpush.xpose.msra.mxu0 0.0
    %348 = vmatpush.xpose.msra.mxu0 0.0
    %349 = vmatpush.xpose.msra.mxu0 0.0
    %350 = vmatpush.xpose.msra.mxu0 0.0
    %351 = vmatpush.xpose.msra.mxu0 0.0
    %352 = vmatpush.xpose.msra.mxu0 0.0
    %353 = vmatpush.xpose.msra.mxu0 0.0
    %354 = vmatpush.xpose.msra.mxu0 %v337
    %355 = vmatmul.f32.gmra.mxu0 %v335
    %v356 = vpop.f32.mrf.mxu0
    %v357 = vadd.f32 0.0, %v356
    %358 = vdwg.mxu0
    %359 = vrot.lane.b32.xlu0 %v127, 112
    %v360 = vpop.permute.xlu0 %359
    %361 = vrot.lane.b32.xlu0 %v164, 112
    %v362 = vpop.permute.xlu0 %361
    %v363 = vsel %vm203, %v360, 0
    %v365 = vsel %vm203, %v362, 0
    %367 = vmatpush.xpose.msra.mxu0 0.0
    %368 = vmatpush.xpose.msra.mxu0 0.0
    %369 = vmatpush.xpose.msra.mxu0 0.0
    %370 = vmatpush.xpose.msra.mxu0 0.0
    %371 = vmatpush.xpose.msra.mxu0 0.0
    %372 = vmatpush.xpose.msra.mxu0 0.0
    %373 = vmatpush.xpose.msra.mxu0 0.0
    %374 = vmatpush.xpose.msra.mxu0 0.0
    %375 = vmatpush.xpose.msra.mxu0 0.0
    %376 = vmatpush.xpose.msra.mxu0 0.0
    %377 = vmatpush.xpose.msra.mxu0 0.0
    %378 = vmatpush.xpose.msra.mxu0 0.0
    %379 = vmatpush.xpose.msra.mxu0 0.0
    %380 = vmatpush.xpose.msra.mxu0 0.0
    %381 = vmatpush.xpose.msra.mxu0 0.0
    %382 = vmatpush.xpose.msra.mxu0 %v365
    %383 = vmatmul.f32.gmra.mxu0 %v363
    %v384 = vpop.f32.mrf.mxu0
    %v385 = vadd.f32 0.0, %v384
    %386 = vdwg.mxu0
    %v387 = vsel %vm256, -1e+09, %v357
    %v388 = vsel %vm257, -1e+09, %v385
    %v389 = vsel %vm260, %v387, -inf
    %390 = vmax.xlane.f32.xlu0 %v389
    %v391 = vpop.xlane.xlu0 %390
    %v392 = vsel %vm260, %v388, -inf
    %393 = vmax.xlane.f32.xlu0 %v392
    %v394 = vpop.xlane.xlu0 %393
    %v395 = vsub.f32 %v387, %v391
    %v396 = vsub.f32 %v388, %v394
    %v397 = vmul.f32 %v395, 1.442695
    %v398 = vpow.pop %v397
    %v399 = vmul.f32 %v396, 1.442695
    %v400 = vpow.pop %v399
    %v401 = vsel %vm260, %v398, 0.0
    %402 = vadd.xlane.f32.xlu0 %v401
    %v403 = vpop.xlane.xlu0 %402
    %v404 = vsel %vm260, %v400, 0.0
    %405 = vadd.xlane.f32.xlu0 %v404
    %v406 = vpop.xlane.xlu0 %405
    %v407 = vrcp.pop %v403
    %v408 = vrcp.pop %v406
    %v409 = vmul.f32 %v398, %v407
    %v410 = vmul.f32 %v400, %v408
    %s411 = scalar_lea.vmem [#allocation8], 8
    %412 = vst.msk [vmem:[%s411] sm:$0xff] %vm260, %v409
    %413 = vst.msk [vmem:[%s411 + $0x20] sm:$0xff] %vm260, %v410
    %415 = vrot.lane.b32.xlu0 %v198, 112
    %v416 = vpop.permute.xlu0 %415
    %v419 = vsel %vm260, %v409, 0
    %421 = vmatpush.msra.mxu0 0.0
    %422 = vmatpush.msra.mxu0 0.0
    %423 = vmatpush.msra.mxu0 0.0
    %424 = vmatpush.msra.mxu0 0.0
    %425 = vmatpush.msra.mxu0 0.0
    %426 = vmatpush.msra.mxu0 0.0
    %427 = vmatpush.msra.mxu0 0.0
    %428 = vmatpush.msra.mxu0 0.0
    %429 = vmatpush.msra.mxu0 0.0
    %430 = vmatpush.msra.mxu0 0.0
    %431 = vmatpush.msra.mxu0 0.0
    %432 = vmatpush.msra.mxu0 0.0
    %433 = vmatpush.msra.mxu0 0.0
    %434 = vmatpush.msra.mxu0 0.0
    %435 = vmatpush.msra.mxu0 0.0
    %436 = vmatpush.msra.mxu0 %v416
    %437 = vmatmul.f32.gmra.mxu0 %v419
    %v438 = vpop.f32.mrf.mxu0
    %v439 = vadd.f32 0.0, %v438
    %440 = vdwg.mxu0
    %442 = vrot.lane.b32.xlu0 %v201, 112
    %v443 = vpop.permute.xlu0 %442
    %v446 = vsel %vm260, %v410, 0
    %448 = vmatpush.msra.mxu0 0.0
    %449 = vmatpush.msra.mxu0 0.0
    %450 = vmatpush.msra.mxu0 0.0
    %451 = vmatpush.msra.mxu0 0.0
    %452 = vmatpush.msra.mxu0 0.0
    %453 = vmatpush.msra.mxu0 0.0
    %454 = vmatpush.msra.mxu0 0.0
    %455 = vmatpush.msra.mxu0 0.0
    %456 = vmatpush.msra.mxu0 0.0
    %457 = vmatpush.msra.mxu0 0.0
    %458 = vmatpush.msra.mxu0 0.0
    %459 = vmatpush.msra.mxu0 0.0
    %460 = vmatpush.msra.mxu0 0.0
    %461 = vmatpush.msra.mxu0 0.0
    %462 = vmatpush.msra.mxu0 0.0
    %463 = vmatpush.msra.mxu0 %v443
    %464 = vmatmul.f32.gmra.mxu0 %v446
    %v465 = vpop.f32.mrf.mxu0
    %v466 = vadd.f32 0.0, %v465
    %467 = vdwg.mxu0
    %468 = vrot.lane.b32.xlu0 %v124, 96
    %v469 = vpop.permute.xlu0 %468
    %470 = vrot.lane.b32.xlu0 %v161, 96
    %v471 = vpop.permute.xlu0 %470
    %v472 = vsel %vm203, %v469, 0
    %v474 = vsel %vm203, %v471, 0
    %476 = vmatpush.xpose.msra.mxu0 0.0
    %477 = vmatpush.xpose.msra.mxu0 0.0
    %478 = vmatpush.xpose.msra.mxu0 0.0
    %479 = vmatpush.xpose.msra.mxu0 0.0
    %480 = vmatpush.xpose.msra.mxu0 0.0
    %481 = vmatpush.xpose.msra.mxu0 0.0
    %482 = vmatpush.xpose.msra.mxu0 0.0
    %483 = vmatpush.xpose.msra.mxu0 0.0
    %484 = vmatpush.xpose.msra.mxu0 0.0
    %485 = vmatpush.xpose.msra.mxu0 0.0
    %486 = vmatpush.xpose.msra.mxu0 0.0
    %487 = vmatpush.xpose.msra.mxu0 0.0
    %488 = vmatpush.xpose.msra.mxu0 0.0
    %489 = vmatpush.xpose.msra.mxu0 0.0
    %490 = vmatpush.xpose.msra.mxu0 0.0
    %491 = vmatpush.xpose.msra.mxu0 %v474
    %492 = vmatmul.f32.gmra.mxu0 %v472
    %v493 = vpop.f32.mrf.mxu0
    %v494 = vadd.f32 0.0, %v493
    %495 = vdwg.mxu0
    %496 = vrot.lane.b32.xlu0 %v127, 96
    %v497 = vpop.permute.xlu0 %496
    %498 = vrot.lane.b32.xlu0 %v164, 96
    %v499 = vpop.permute.xlu0 %498
    %v500 = vsel %vm203, %v497, 0
    %v502 = vsel %vm203, %v499, 0
    %504 = vmatpush.xpose.msra.mxu0 0.0
    %505 = vmatpush.xpose.msra.mxu0 0.0
    %506 = vmatpush.xpose.msra.mxu0 0.0
    %507 = vmatpush.xpose.msra.mxu0 0.0
    %508 = vmatpush.xpose.msra.mxu0 0.0
    %509 = vmatpush.xpose.msra.mxu0 0.0
    %510 = vmatpush.xpose.msra.mxu0 0.0
    %511 = vmatpush.xpose.msra.mxu0 0.0
    %512 = vmatpush.xpose.msra.mxu0 0.0
    %513 = vmatpush.xpose.msra.mxu0 0.0
    %514 = vmatpush.xpose.msra.mxu0 0.0
    %515 = vmatpush.xpose.msra.mxu0 0.0
    %516 = vmatpush.xpose.msra.mxu0 0.0
    %517 = vmatpush.xpose.msra.mxu0 0.0
    %518 = vmatpush.xpose.msra.mxu0 0.0
    %519 = vmatpush.xpose.msra.mxu0 %v502
    %520 = vmatmul.f32.gmra.mxu0 %v500
    %v521 = vpop.f32.mrf.mxu0
    %v522 = vadd.f32 0.0, %v521
    %523 = vdwg.mxu0
    %v524 = vsel %vm256, -1e+09, %v494
    %v525 = vsel %vm257, -1e+09, %v522
    %v526 = vsel %vm260, %v524, -inf
    %527 = vmax.xlane.f32.xlu0 %v526
    %v528 = vpop.xlane.xlu0 %527
    %v529 = vsel %vm260, %v525, -inf
    %530 = vmax.xlane.f32.xlu0 %v529
    %v531 = vpop.xlane.xlu0 %530
    %v532 = vsub.f32 %v524, %v528
    %v533 = vsub.f32 %v525, %v531
    %v534 = vmul.f32 %v532, 1.442695
    %v535 = vpow.pop %v534
    %v536 = vmul.f32 %v533, 1.442695
    %v537 = vpow.pop %v536
    %v538 = vsel %vm260, %v535, 0.0
    %539 = vadd.xlane.f32.xlu0 %v538
    %v540 = vpop.xlane.xlu0 %539
    %v541 = vsel %vm260, %v537, 0.0
    %542 = vadd.xlane.f32.xlu0 %v541
    %v543 = vpop.xlane.xlu0 %542
    %v544 = vrcp.pop %v540
    %v545 = vrcp.pop %v543
    %v546 = vmul.f32 %v535, %v544
    %v547 = vmul.f32 %v537, %v545
    %s548 = scalar_lea.vmem [#allocation8], 16
    %549 = vst.msk [vmem:[%s548] sm:$0xff] %vm260, %v546
    %550 = vst.msk [vmem:[%s548 + $0x20] sm:$0xff] %vm260, %v547
    %551 = vrot.lane.b32.xlu0 %v198, 96
    %v552 = vpop.permute.xlu0 %551
    %v555 = vsel %vm260, %v546, 0
    %557 = vmatpush.msra.mxu0 0.0
    %558 = vmatpush.msra.mxu0 0.0
    %559 = vmatpush.msra.mxu0 0.0
    %560 = vmatpush.msra.mxu0 0.0
    %561 = vmatpush.msra.mxu0 0.0
    %562 = vmatpush.msra.mxu0 0.0
    %563 = vmatpush.msra.mxu0 0.0
    %564 = vmatpush.msra.mxu0 0.0
    %565 = vmatpush.msra.mxu0 0.0
    %566 = vmatpush.msra.mxu0 0.0
    %567 = vmatpush.msra.mxu0 0.0
    %568 = vmatpush.msra.mxu0 0.0
    %569 = vmatpush.msra.mxu0 0.0
    %570 = vmatpush.msra.mxu0 0.0
    %571 = vmatpush.msra.mxu0 0.0
    %572 = vmatpush.msra.mxu0 %v552
    %573 = vmatmul.f32.gmra.mxu0 %v555
    %v574 = vpop.f32.mrf.mxu0
    %v575 = vadd.f32 0.0, %v574
    %576 = vdwg.mxu0
    %577 = vrot.lane.b32.xlu0 %v201, 96
    %v578 = vpop.permute.xlu0 %577
    %v581 = vsel %vm260, %v547, 0
    %583 = vmatpush.msra.mxu0 0.0
    %584 = vmatpush.msra.mxu0 0.0
    %585 = vmatpush.msra.mxu0 0.0
    %586 = vmatpush.msra.mxu0 0.0
    %587 = vmatpush.msra.mxu0 0.0
    %588 = vmatpush.msra.mxu0 0.0
    %589 = vmatpush.msra.mxu0 0.0
    %590 = vmatpush.msra.mxu0 0.0
    %591 = vmatpush.msra.mxu0 0.0
    %592 = vmatpush.msra.mxu0 0.0
    %593 = vmatpush.msra.mxu0 0.0
    %594 = vmatpush.msra.mxu0 0.0
    %595 = vmatpush.msra.mxu0 0.0
    %596 = vmatpush.msra.mxu0 0.0
    %597 = vmatpush.msra.mxu0 0.0
    %598 = vmatpush.msra.mxu0 %v578
    %599 = vmatmul.f32.gmra.mxu0 %v581
    %v600 = vpop.f32.mrf.mxu0
    %v601 = vadd.f32 0.0, %v600
    %602 = vdwg.mxu0
    %603 = vrot.lane.b32.xlu0 %v124, 80
    %v604 = vpop.permute.xlu0 %603
    %605 = vrot.lane.b32.xlu0 %v161, 80
    %v606 = vpop.permute.xlu0 %605
    %v607 = vsel %vm203, %v604, 0
    %v609 = vsel %vm203, %v606, 0
    %611 = vmatpush.xpose.msra.mxu0 0.0
    %612 = vmatpush.xpose.msra.mxu0 0.0
    %613 = vmatpush.xpose.msra.mxu0 0.0
    %614 = vmatpush.xpose.msra.mxu0 0.0
    %615 = vmatpush.xpose.msra.mxu0 0.0
    %616 = vmatpush.xpose.msra.mxu0 0.0
    %617 = vmatpush.xpose.msra.mxu0 0.0
    %618 = vmatpush.xpose.msra.mxu0 0.0
    %619 = vmatpush.xpose.msra.mxu0 0.0
    %620 = vmatpush.xpose.msra.mxu0 0.0
    %621 = vmatpush.xpose.msra.mxu0 0.0
    %622 = vmatpush.xpose.msra.mxu0 0.0
    %623 = vmatpush.xpose.msra.mxu0 0.0
    %624 = vmatpush.xpose.msra.mxu0 0.0
    %625 = vmatpush.xpose.msra.mxu0 0.0
    %626 = vmatpush.xpose.msra.mxu0 %v609
    %627 = vmatmul.f32.gmra.mxu0 %v607
    %v628 = vpop.f32.mrf.mxu0
    %v629 = vadd.f32 0.0, %v628
    %630 = vdwg.mxu0
    %631 = vrot.lane.b32.xlu0 %v127, 80
    %v632 = vpop.permute.xlu0 %631
    %633 = vrot.lane.b32.xlu0 %v164, 80
    %v634 = vpop.permute.xlu0 %633
    %v635 = vsel %vm203, %v632, 0
    %v637 = vsel %vm203, %v634, 0
    %639 = vmatpush.xpose.msra.mxu0 0.0
    %640 = vmatpush.xpose.msra.mxu0 0.0
    %641 = vmatpush.xpose.msra.mxu0 0.0
    %642 = vmatpush.xpose.msra.mxu0 0.0
    %643 = vmatpush.xpose.msra.mxu0 0.0
    %644 = vmatpush.xpose.msra.mxu0 0.0
    %645 = vmatpush.xpose.msra.mxu0 0.0
    %646 = vmatpush.xpose.msra.mxu0 0.0
    %647 = vmatpush.xpose.msra.mxu0 0.0
    %648 = vmatpush.xpose.msra.mxu0 0.0
    %649 = vmatpush.xpose.msra.mxu0 0.0
    %650 = vmatpush.xpose.msra.mxu0 0.0
    %651 = vmatpush.xpose.msra.mxu0 0.0
    %652 = vmatpush.xpose.msra.mxu0 0.0
    %653 = vmatpush.xpose.msra.mxu0 0.0
    %654 = vmatpush.xpose.msra.mxu0 %v637
    %655 = vmatmul.f32.gmra.mxu0 %v635
    %v656 = vpop.f32.mrf.mxu0
    %v657 = vadd.f32 0.0, %v656
    %658 = vdwg.mxu0
    %v659 = vsel %vm256, -1e+09, %v629
    %v660 = vsel %vm257, -1e+09, %v657
    %v661 = vsel %vm260, %v659, -inf
    %662 = vmax.xlane.f32.xlu0 %v661
    %v663 = vpop.xlane.xlu0 %662
    %v664 = vsel %vm260, %v660, -inf
    %665 = vmax.xlane.f32.xlu0 %v664
    %v666 = vpop.xlane.xlu0 %665
    %v667 = vsub.f32 %v659, %v663
    %v668 = vsub.f32 %v660, %v666
    %v669 = vmul.f32 %v667, 1.442695
    %v670 = vpow.pop %v669
    %v671 = vmul.f32 %v668, 1.442695
    %v672 = vpow.pop %v671
    %v673 = vsel %vm260, %v670, 0.0
    %674 = vadd.xlane.f32.xlu0 %v673
    %v675 = vpop.xlane.xlu0 %674
    %v676 = vsel %vm260, %v672, 0.0
    %677 = vadd.xlane.f32.xlu0 %v676
    %v678 = vpop.xlane.xlu0 %677
    %v679 = vrcp.pop %v675
    %v680 = vrcp.pop %v678
    %v681 = vmul.f32 %v670, %v679
    %v682 = vmul.f32 %v672, %v680
    %s683 = scalar_lea.vmem [#allocation8], 24
    %684 = vst.msk [vmem:[%s683] sm:$0xff] %vm260, %v681
    %685 = vst.msk [vmem:[%s683 + $0x20] sm:$0xff] %vm260, %v682
    %686 = vrot.lane.b32.xlu0 %v198, 80
    %v687 = vpop.permute.xlu0 %686
    %v690 = vsel %vm260, %v681, 0
    %692 = vmatpush.msra.mxu0 0.0
    %693 = vmatpush.msra.mxu0 0.0
    %694 = vmatpush.msra.mxu0 0.0
    %695 = vmatpush.msra.mxu0 0.0
    %696 = vmatpush.msra.mxu0 0.0
    %697 = vmatpush.msra.mxu0 0.0
    %698 = vmatpush.msra.mxu0 0.0
    %699 = vmatpush.msra.mxu0 0.0
    %700 = vmatpush.msra.mxu0 0.0
    %701 = vmatpush.msra.mxu0 0.0
    %702 = vmatpush.msra.mxu0 0.0
    %703 = vmatpush.msra.mxu0 0.0
    %704 = vmatpush.msra.mxu0 0.0
    %705 = vmatpush.msra.mxu0 0.0
    %706 = vmatpush.msra.mxu0 0.0
    %707 = vmatpush.msra.mxu0 %v687
    %708 = vmatmul.f32.gmra.mxu0 %v690
    %v709 = vpop.f32.mrf.mxu0
    %v710 = vadd.f32 0.0, %v709
    %711 = vdwg.mxu0
    %712 = vrot.lane.b32.xlu0 %v201, 80
    %v713 = vpop.permute.xlu0 %712
    %v716 = vsel %vm260, %v682, 0
    %718 = vmatpush.msra.mxu0 0.0
    %719 = vmatpush.msra.mxu0 0.0
    %720 = vmatpush.msra.mxu0 0.0
    %721 = vmatpush.msra.mxu0 0.0
    %722 = vmatpush.msra.mxu0 0.0
    %723 = vmatpush.msra.mxu0 0.0
    %724 = vmatpush.msra.mxu0 0.0
    %725 = vmatpush.msra.mxu0 0.0
    %726 = vmatpush.msra.mxu0 0.0
    %727 = vmatpush.msra.mxu0 0.0
    %728 = vmatpush.msra.mxu0 0.0
    %729 = vmatpush.msra.mxu0 0.0
    %730 = vmatpush.msra.mxu0 0.0
    %731 = vmatpush.msra.mxu0 0.0
    %732 = vmatpush.msra.mxu0 0.0
    %733 = vmatpush.msra.mxu0 %v713
    %734 = vmatmul.f32.gmra.mxu0 %v716
    %v735 = vpop.f32.mrf.mxu0
    %v736 = vadd.f32 0.0, %v735
    %737 = vdwg.mxu0
    %740 = vrot.lane.b32.xlu0 %v439, 16
    %v741 = vpop.permute.xlu0 %740
    %742 = vrot.lane.b32.xlu0 %v466, 16
    %v743 = vpop.permute.xlu0 %742
    %748 = vrot.lane.b32.xlu0 %v575, 32
    %v749 = vpop.permute.xlu0 %748
    %750 = vrot.lane.b32.xlu0 %v601, 32
    %v751 = vpop.permute.xlu0 %750
    %756 = vrot.lane.b32.xlu0 %v710, 48
    %v757 = vpop.permute.xlu0 %756
    %758 = vrot.lane.b32.xlu0 %v736, 48
    %v759 = vpop.permute.xlu0 %758
    %v762 = vsel %vm203, %v306, %v741
    %v763 = vsel %vm203, %v329, %v743
    %v764 = vsel %vm99, %v762, %v749
    %v765 = vsel %vm99, %v763, %v751
    %vm766 = vcmask 392192
    %v767 = vsel %vm766, %v764, %v757
    %v768 = vsel %vm766, %v765, %v759
    %v769 = vld [vmem:[%s10] sm:$0xff]
    %v770 = vld [vmem:[%s10 + $0x8] sm:$0xff]
    %v771 = vld [vmem:[%s10 + $0x10] sm:$0xff]
    %v772 = vld [vmem:[%s10 + $0x18] sm:$0xff]
    %v773 = vld [vmem:[%s10 + $0x20] sm:$0xff]
    %v774 = vld [vmem:[%s10 + $0x28] sm:$0xff]
    %v775 = vld [vmem:[%s10 + $0x30] sm:$0xff]
    %v776 = vld [vmem:[%s10 + $0x38] sm:$0xff]
    %v777 = vld [vmem:[%s11] sm:$0x1]
    %v779 = vperm.slane %v777, 0
    %vm781 = vcmask 523264
    %v783 = vsel %vm781, %v767, 0
    %v786 = vsel %vm781, %v768, 0
    %788 = vmatpush.msra.mxu0 0.0
    %789 = vmatpush.msra.mxu0 0.0
    %790 = vmatpush.msra.mxu0 0.0
    %791 = vmatpush.msra.mxu0 0.0
    %792 = vmatpush.msra.mxu0 0.0
    %793 = vmatpush.msra.mxu0 0.0
    %794 = vmatpush.msra.mxu0 0.0
    %795 = vmatpush.msra.mxu0 0.0
    %796 = vmatpush.msra.mxu0 %v776
    %797 = vmatpush.msra.mxu0 %v775
    %798 = vmatpush.msra.mxu0 %v774
    %799 = vmatpush.msra.mxu0 %v773
    %800 = vmatpush.msra.mxu0 %v772
    %801 = vmatpush.msra.mxu0 %v771
    %802 = vmatpush.msra.mxu0 %v770
    %803 = vmatpush.msra.mxu0 %v769
    %804 = vmatmul.f32.gmra.mxu0 %v783
    %v805 = vpop.f32.mrf.mxu0
    %v806 = vadd.f32 %v779, %v805
    %807 = vmatmul.f32.gmra.mxu0 %v786
    %v808 = vpop.f32.mrf.mxu0
    %v809 = vadd.f32 %v779, %v808
    %810 = vdwg.mxu0
    %v811 = vadd.f32 %v806, %v83
    %v812 = vadd.f32 %v809, %v84
    %v813 = vsel %vm99, %v811, 0.0
    %814 = vadd.xlane.f32.xlu0 %v813
    %v815 = vpop.xlane.xlu0 %814
    %v816 = vsel %vm99, %v812, 0.0
    %817 = vadd.xlane.f32.xlu0 %v816
    %v818 = vpop.xlane.xlu0 %817
    %v819 = vrcp.pop 32.0
    %v820 = vmul.f32 32.0, %v819
    %v821 = vsub.f32 1.0, %v820
    %v822 = vmul.f32 %v819, %v821
    %v823 = vadd.f32 %v819, %v822
    %vm824 = vweird.f32 %v819
    %v825 = vsel %vm824, %v819, %v823
    %v826 = vmul.f32 %v815, %v825
    %v827 = vmul.f32 %v818, %v825
    %v828 = vsub.f32 %v811, %v826
    %v829 = vsub.f32 %v812, %v827
    %v830 = vmul.f32 %v828, %v828
    %v831 = vmul.f32 %v829, %v829
    %v832 = vsel %vm99, %v830, 0.0
    %833 = vadd.xlane.f32.xlu0 %v832
    %v834 = vpop.xlane.xlu0 %833
    %v835 = vsel %vm99, %v831, 0.0
    %836 = vadd.xlane.f32.xlu0 %v835
    %v837 = vpop.xlane.xlu0 %836
    %v838 = vmul.f32 %v834, %v825
    %v839 = vmul.f32 %v837, %v825
    %v840 = vadd.f32 %v838, 1e-05
    %v841 = vadd.f32 %v839, 1e-05
    %v842 = vrsqrt.pop %v840
    %v843 = vmul.f32 %v842, %v840
    %v844 = vmul.f32 %v843, %v842
    %v845 = vmul.f32 0.5, %v844
    %v846 = vsub.f32 1.5, %v845
    %v847 = vmul.f32 %v842, %v846
    %vm848 = vweird.f32 %v840
    %vm849 = vweird.f32 %v842
    %vm850 = vmor %vm848, %vm849
    %v851 = vsel %vm850, %v842, %v847
    %v852 = vrsqrt.pop %v841
    %v853 = vmul.f32 %v852, %v841
    %v854 = vmul.f32 %v853, %v852
    %v855 = vmul.f32 0.5, %v854
    %v856 = vsub.f32 1.5, %v855
    %v857 = vmul.f32 %v852, %v856
    %vm858 = vweird.f32 %v841
    %vm859 = vweird.f32 %v852
    %vm860 = vmor %vm858, %vm859
    %v861 = vsel %vm860, %v852, %v857
    %v862 = vmul.f32 %v828, %v851
    %v863 = vmul.f32 %v829, %v861
    %v864 = vld [vmem:[%s12] sm:$0x1]
    %v866 = vperm.slane %v864, 0
    %v868 = vmul.f32 %v862, %v866
    %v869 = vmul.f32 %v863, %v866
    %v870 = vld [vmem:[%s13] sm:$0x1]
    %v872 = vperm.slane %v870, 0
    %v874 = vadd.f32 %v868, %v872
    %v875 = vadd.f32 %v869, %v872
    %876 = vst.msk [vmem:[#allocation7] sm:$0xff] %vm99, %v874
    %877 = vst.msk [vmem:[#allocation7 + $0x8] sm:$0xff] %vm99, %v875
    // Predicated region
    $region66: #{multi_head_attention.1} parent=1 // pred_check
      _
    $region67: #{multi_head_attention.1} parent=1 // pred_check_branch
      %879 = sbr.rel (0) target = $region69
    $region68: #{multi_head_attention.1} parent=1 // pred_region
      %881 = vsyncadd [#allocation4], 0
      %s882 = sshll.u32 [#allocation7], 4
      %s883 = int_to_ptr.vmem [resolvable:$true] %s882
      %s884 = sshll.u32 %s14, 4
      %s885 = int_to_ptr.hbm [resolvable:$true] %s884
      %890 = dma.vmem_to_hbm [thread:$0]  %s883, 256, %s885, [#allocation4], 128, 128, 8
    $region69: #{multi_head_attention.1} parent=1 // pred_fallthru
      _
    // Predicated region
    $region70: #{multi_head_attention.1} parent=1 // pred_check
      _
    $region71: #{multi_head_attention.1} parent=1 // pred_check_branch
      %892 = sbr.rel (0) target = $region73
    $region72: #{multi_head_attention.1} parent=1 // pred_region
      %894 = vsyncadd [#allocation9], 0
      %s895 = sshll.u32 [#allocation8], 4
      %s896 = int_to_ptr.vmem [resolvable:$true] %s895
      %s897 = sshll.u32 %s15, 4
      %s898 = int_to_ptr.hbm [resolvable:$true] %s897
      %903 = dma.vmem_to_hbm [thread:$0]  %s896, 1024, %s898, [#allocation9], 128, 128, 8
    $region73: #{multi_head_attention.1} parent=1 // pred_fallthru
      _
    // Predicated region
    $region74: #{multi_head_attention.1} parent=1 // pred_check
      _
    $region75: #{multi_head_attention.1} parent=1 // pred_check_branch
      %905 = sbr.rel (0) target = $region77
    $region76: #{multi_head_attention.1} parent=1 // pred_region
      %907 = dma.done [#allocation4], 256
    $region77: #{multi_head_attention.1} parent=1 // pred_fallthru
      _
    // Predicated region
    $region78: #{multi_head_attention.1} parent=1 // pred_check
      _
    $region79: #{multi_head_attention.1} parent=1 // pred_check_branch
      %909 = sbr.rel (0) target = $region81
    $region80: #{multi_head_attention.1} parent=1 // pred_region
      %911 = dma.done [#allocation9], 1024
    $region81: #{multi_head_attention.1} parent=1 // pred_fallthru
      _
    %912 = vsyncpa [#allocation3], 1
    %913 = vsyncpa [#allocation6], 1
    %914 = vsyncpa [#allocation4], 1
    %915 = vsyncpa [#allocation9], 1

</llo_original>
